<compile_context>
chip_gen: v6e
topology: v6e:2x2x1
jax: 0.10.0
libtpu: 0.0.40
codegen_flags: <defaults>
</compile_context>

<pallas_src>
import functools

import jax
import jax.numpy as jnp
from jax.experimental import pallas as pl
from jax.experimental.pallas import tpu as pltpu

LANE = 128
SUB = 8


def _masked_mse_kernel(pred_ref, tgt_ref, *out_refs, use_mask, nodata):
    """One grid step: accumulate sum of squared diffs (and valid count).

    pred_ref: (n_blk, h_blk, W) in mask mode (channel 0 only, squeezed) or
              (n_blk, C, h_blk, W) otherwise.        (native dtype)
    tgt_ref:  (n_blk, h_blk, W)  (channel squeezed). (native dtype)
    out_refs: resident (1, acc_sub, W) f32 accumulator block(s), one
              (+ count in mask mode) per batch-block.
    """
    if use_mask:
        sum_ref, cnt_ref = out_refs
    else:
        (sum_ref,) = out_refs
        cnt_ref = None

    j = pl.program_id(1)

    @pl.when(j == 0)
    def _():
        sum_ref[...] = jnp.zeros_like(sum_ref)
        if use_mask:
            cnt_ref[...] = jnp.zeros_like(cnt_ref)

    t = tgt_ref[...].astype(jnp.float32)              # (n_blk, h_blk, W)
    if use_mask:
        p = pred_ref[...].astype(jnp.float32)         # (n_blk, h_blk, W)
        diff = p - t
        vf = (t != jnp.float32(nodata)).astype(jnp.float32)
        sq = diff * diff * vf
    else:
        p = pred_ref[...].astype(jnp.float32)         # (n_blk, C, h_blk, W)
        diff = p - t[:, None, :, :]                   # broadcast target over C
        sq = diff * diff
        vf = None

    h_blk, w = sq.shape[-2], sq.shape[-1]
    acc_sub = sum_ref.shape[1]

    def fold(x):
        # Collapse leading axes, then sublane groups: pure vreg-wise VPU adds.
        x = x.reshape(-1, h_blk, w).sum(axis=0)                       # (h_blk, W)
        if acc_sub != h_blk:
            x = x.reshape(h_blk // acc_sub, acc_sub, w).sum(axis=0)   # (acc_sub, W)
        return x[None]                                                # (1, acc_sub, W)

    sum_ref[...] += fold(sq)
    if use_mask:
        cnt_ref[...] += fold(vf)


def _pick_h_block(H, w_pad, c_eff, elem_budget):
    """Largest multiple-of-8 divisor of H (or H itself) within the element budget."""
    cands = sorted({d for d in range(SUB, H + 1, SUB) if H % d == 0} | {H})
    fit = [d for d in cands if c_eff * d * w_pad <= elem_budget]
    return fit[-1] if fit else cands[0]


def masked_mse_loss(output, target, *, mask: bool, nodata: int,
                    elem_budget: int = 2 * 1024 * 1024,
                    vmem_limit_bytes=None):
    """JAX/Pallas equivalent of MaskedMSELoss(mask, nodata).forward(output, target).

    output: (N, C, H, W), target: (N, 1, H, W). Native dtype is streamed; the
    kernel upcasts to f32 internally.
    """
    N, C, H, W = output.shape
    assert target.shape == (N, 1, H, W), target.shape

    c_eff = 1 if mask else C
    w_pad = ((W + LANE - 1) // LANE) * LANE           # lane-padded width (VMEM sizing)

    h_blk = _pick_h_block(H, w_pad, c_eff, elem_budget)
    per_img = c_eff * h_blk * w_pad
    n_cap = N // 2 if N >= 2 else 1                   # >=2 parallel blocks for v7x
    n_blk = max(1, min(n_cap, elem_budget // max(per_img, 1), N))
    while N % n_blk:
        n_blk -= 1

    g0, g1 = N // n_blk, H // h_blk
    acc_sub = SUB if h_blk % SUB == 0 else h_blk      # fold target height

    pred_item = jnp.dtype(output.dtype).itemsize
    tgt_item = jnp.dtype(target.dtype).itemsize
    h_pad = ((h_blk + SUB - 1) // SUB) * SUB
    if vmem_limit_bytes is None:
        # 2 pipeline buffers per input block (lane/sublane padded) + headroom,
        # clamped to stay safe on v7x (64 MiB physical VMEM).
        need = 2 * n_blk * h_pad * w_pad * (c_eff * pred_item + tgt_item)
        vmem_limit_bytes = int(min(max(need + (4 << 20), 32 << 20), 48 << 20))

    if mask:
        # Channel axis squeezed, index 0 -> only channel 0 is DMA'd (torch's
        # output[:, 0].unsqueeze(1)) with zero wrapper copies.
        pred_spec = pl.BlockSpec((n_blk, None, h_blk, W), lambda i, j: (i, 0, j, 0))
    else:
        pred_spec = pl.BlockSpec((n_blk, C, h_blk, W), lambda i, j: (i, 0, j, 0))
    tgt_spec = pl.BlockSpec((n_blk, None, h_blk, W), lambda i, j: (i, 0, j, 0))

    out_shapes = [jax.ShapeDtypeStruct((g0, acc_sub, W), jnp.float32)]
    out_specs = [pl.BlockSpec((1, acc_sub, W), lambda i, j: (i, 0, 0))]
    if mask:
        out_shapes.append(jax.ShapeDtypeStruct((g0, acc_sub, W), jnp.float32))
        out_specs.append(pl.BlockSpec((1, acc_sub, W), lambda i, j: (i, 0, 0)))

    kernel = functools.partial(_masked_mse_kernel, use_mask=mask,
                               nodata=float(nodata))

    elems = N * c_eff * H * W
    cost = pl.CostEstimate(
        flops=(6 if mask else 3) * elems,
        transcendentals=0,
        bytes_accessed=(elems * pred_item + N * H * W * tgt_item
                        + (2 if mask else 1) * g0 * acc_sub * W * 4),
    )

    results = pl.pallas_call(
        kernel,
        out_shape=tuple(out_shapes),
        grid_spec=pltpu.PrefetchScalarGridSpec(
            num_scalar_prefetch=0,
            grid=(g0, g1),
            in_specs=[pred_spec, tgt_spec],
            out_specs=tuple(out_specs),
        ),
        compiler_params=pltpu.CompilerParams(
            dimension_semantics=("parallel", "arbitrary"),
            vmem_limit_bytes=vmem_limit_bytes,
        ),
        cost_estimate=cost,
    )(output, target)

    if mask:
        sums, cnts = results
        total = jnp.sum(sums)
        denom = jnp.sum(cnts)
    else:
        total = jnp.sum(results[0])
        denom = jnp.float32(N * C * H * W)
    return total / denom


def _reference(output, target, *, mask: bool, nodata: int):
    output = output.astype(jnp.float32)
    target = target.astype(jnp.float32)
    if mask:
        m = target != nodata
        out = output[:, 0:1, :, :]
        sq = (out - target) ** 2
        return jnp.sum(jnp.where(m, sq, 0.0)) / jnp.sum(m.astype(jnp.float32))
    return jnp.mean((output - target) ** 2)


def _make_inputs(key, shape, nodata, dtype=jnp.float32):
    N, C, H, W = shape
    k1, k2, k3 = jax.random.split(key, 3)
    output = jax.random.normal(k1, (N, C, H, W), dtype=jnp.float32)
    target = jax.random.normal(k2, (N, 1, H, W), dtype=jnp.float32)
    nodata_mask = jax.random.bernoulli(k3, p=0.3, shape=(N, 1, H, W))
    target = jnp.where(nodata_mask, jnp.float32(nodata), target)
    return output.astype(dtype), target.astype(dtype)


if __name__ == "__main__":
    key = jax.random.PRNGKey(0)
    nodata = -1

    # --- main shapes (N=2, C=4, 16x16), f32 -------------------------------
    output, target = _make_inputs(key, (2, 4, 16, 16), nodata)

    ref_masked = _reference(output, target, mask=True, nodata=nodata)
    ref_full = _reference(output, target, mask=False, nodata=nodata)

    loss_masked = masked_mse_loss(output, target, mask=True, nodata=nodata)
    jax.block_until_ready(loss_masked)
    assert jnp.allclose(loss_masked, ref_masked, rtol=1e-5, atol=1e-5), (
        loss_masked, ref_masked)

    loss_full = masked_mse_loss(output, target, mask=False, nodata=nodata)
    jax.block_until_ready(loss_full)
    assert jnp.allclose(loss_full, ref_full, rtol=1e-5, atol=1e-5), (
        loss_full, ref_full)

    # Force small blocks -> grid (2, 2): exercises multi-step accumulation
    # along the reduction axis and multiple parallel batch blocks.
    loss_masked_s = masked_mse_loss(output, target, mask=True, nodata=nodata,
                                    elem_budget=128)
    jax.block_until_ready(loss_masked_s)
    assert jnp.allclose(loss_masked_s, ref_masked, rtol=1e-5, atol=1e-5), (
        loss_masked_s, ref_masked)

    loss_full_s = masked_mse_loss(output, target, mask=False, nodata=nodata,
                                  elem_budget=128)
    jax.block_until_ready(loss_full_s)
    assert jnp.allclose(loss_full_s, ref_full, rtol=1e-5, atol=1e-5), (
        loss_full_s, ref_full)

    # --- awkward shape (H not a multiple of 8, W not a multiple of 128) ----
    out2, tgt2 = _make_inputs(jax.random.PRNGKey(1), (2, 3, 12, 20), nodata)
    for m in (True, False):
        got = masked_mse_loss(out2, tgt2, mask=m, nodata=nodata)
        jax.block_until_ready(got)
        want = _reference(out2, tgt2, mask=m, nodata=nodata)
        assert jnp.allclose(got, want, rtol=1e-5, atol=1e-5), (m, got, want)

    # --- native bf16 feed (kernel upcasts to f32) --------------------------
    out3, tgt3 = _make_inputs(jax.random.PRNGKey(2), (2, 4, 16, 16), nodata,
                              dtype=jnp.bfloat16)
    for m in (True, False):
        got = masked_mse_loss(out3, tgt3, mask=m, nodata=nodata)
        jax.block_until_ready(got)
        want = _reference(out3, tgt3, mask=m, nodata=nodata)
        assert jnp.allclose(got, want, rtol=1e-3, atol=1e-3), (m, got, want)

    print("KERNEL_OK")
</pallas_src>

<mosaic_0001>
module attributes {stable_mosaic.version = 11 : i64} {
  func.func @_masked_mse_kernel(%arg0: i32, %arg1: i32, %arg2: memref<1x1x16x16xf32, #tpu.memory_space<vmem>>, %arg3: memref<1x1x16x16xf32, #tpu.memory_space<vmem>>, %arg4: memref<1x8x16xf32, #tpu.memory_space<vmem>>, %arg5: memref<1x8x16xf32, #tpu.memory_space<vmem>>) attributes {dimension_semantics = [#tpu.dimension_semantics<parallel>, #tpu.dimension_semantics<arbitrary>], iteration_bounds = array<i64: 2, 1>, scalar_prefetch = 0 : i64, scratch_operands = 0 : i64, tpu.core_type = #tpu.core_type<tc>, window_params = [{transform_indices = @transform_0, window_bounds = array<i64: 1, 1, 16, 16>}, {transform_indices = @transform_1, window_bounds = array<i64: 1, 1, 16, 16>}, {transform_indices = @transform_2, window_bounds = array<i64: 1, 8, 16>}, {transform_indices = @transform_3, window_bounds = array<i64: 1, 8, 16>}]} {
    %c0_i32 = arith.constant 0 : i32
    %0 = arith.cmpi eq, %arg1, %c0_i32 : i32
    %1 = arith.extui %0 : i1 to i32
    %c0_i32_0 = arith.constant 0 : i32
    %2 = arith.cmpi ne, %1, %c0_i32_0 : i32
    scf.if %2 {
      %cst_24 = arith.constant 0.000000e+00 : f32
      %28 = vector.broadcast %cst_24 : f32 to vector<1x8x16xf32>
      %c0_25 = arith.constant 0 : index
      %c0_26 = arith.constant 0 : index
      %c0_27 = arith.constant 0 : index
      %29 = vector.load %arg4[%c0_25, %c0_26, %c0_27] : memref<1x8x16xf32, #tpu.memory_space<vmem>>, vector<1x8x16xf32>
      tpu.vector_store %arg4[%c0_25, %c0_26, %c0_27], %28 {strides = array<i32>} : memref<1x8x16xf32, #tpu.memory_space<vmem>>, vector<1x8x16xf32>,
      %cst_28 = arith.constant 0.000000e+00 : f32
      %30 = vector.broadcast %cst_28 : f32 to vector<1x8x16xf32>
      %c0_29 = arith.constant 0 : index
      %c0_30 = arith.constant 0 : index
      %c0_31 = arith.constant 0 : index
      %31 = vector.load %arg5[%c0_29, %c0_30, %c0_31] : memref<1x8x16xf32, #tpu.memory_space<vmem>>, vector<1x8x16xf32>
      tpu.vector_store %arg5[%c0_29, %c0_30, %c0_31], %30 {strides = array<i32>} : memref<1x8x16xf32, #tpu.memory_space<vmem>>, vector<1x8x16xf32>,
    } else {
    }
    %c0 = arith.constant 0 : index
    %c0_1 = arith.constant 0 : index
    %c0_2 = arith.constant 0 : index
    %c0_3 = arith.constant 0 : index
    %3 = vector.load %arg3[%c0, %c0_1, %c0_2, %c0_3] : memref<1x1x16x16xf32, #tpu.memory_space<vmem>>, vector<1x1x16x16xf32>
    %4 = vector.shape_cast %3 : vector<1x1x16x16xf32> to vector<1x16x16xf32>
    %c0_4 = arith.constant 0 : index
    %c0_5 = arith.constant 0 : index
    %c0_6 = arith.constant 0 : index
    %c0_7 = arith.constant 0 : index
    %5 = vector.load %arg2[%c0_4, %c0_5, %c0_6, %c0_7] : memref<1x1x16x16xf32, #tpu.memory_space<vmem>>, vector<1x1x16x16xf32>
    %6 = vector.shape_cast %5 : vector<1x1x16x16xf32> to vector<1x16x16xf32>
    %7 = arith.subf %6, %4 : vector<1x16x16xf32>
    %cst = arith.constant -1.000000e+00 : f32
    %8 = vector.broadcast %cst : f32 to vector<1x16x16xf32>
    %9 = arith.cmpf one, %4, %8 : vector<1x16x16xf32>
    %10 = arith.extui %9 : vector<1x16x16xi1> to vector<1x16x16xi32>
    %11 = arith.sitofp %10 : vector<1x16x16xi32> to vector<1x16x16xf32>
    %12 = arith.mulf %7, %7 : vector<1x16x16xf32>
    %13 = arith.mulf %12, %11 : vector<1x16x16xf32>
    %c0_8 = arith.constant 0 : index
    %c0_9 = arith.constant 0 : index
    %c0_10 = arith.constant 0 : index
    %14 = vector.load %arg4[%c0_8, %c0_9, %c0_10] : memref<1x8x16xf32, #tpu.memory_space<vmem>>, vector<1x8x16xf32>
    %cst_11 = arith.constant dense<0.000000e+00> : vector<16x16xf32>
    %15 = vector.multi_reduction <add>, %13, %cst_11 [0] : vector<1x16x16xf32> to vector<16x16xf32>
    %16 = vector.shape_cast %15 : vector<16x16xf32> to vector<2x8x16xf32>
    %cst_12 = arith.constant dense<0.000000e+00> : vector<8x16xf32>
    %17 = vector.multi_reduction <add>, %16, %cst_12 [0] : vector<2x8x16xf32> to vector<8x16xf32>
    %18 = vector.shape_cast %17 : vector<8x16xf32> to vector<1x8x16xf32>
    %19 = arith.addf %14, %18 : vector<1x8x16xf32>
    %c0_13 = arith.constant 0 : index
    %c0_14 = arith.constant 0 : index
    %c0_15 = arith.constant 0 : index
    %20 = vector.load %arg4[%c0_13, %c0_14, %c0_15] : memref<1x8x16xf32, #tpu.memory_space<vmem>>, vector<1x8x16xf32>
    tpu.vector_store %arg4[%c0_13, %c0_14, %c0_15], %19 {strides = array<i32>} : memref<1x8x16xf32, #tpu.memory_space<vmem>>, vector<1x8x16xf32>,
    %c0_16 = arith.constant 0 : index
    %c0_17 = arith.constant 0 : index
    %c0_18 = arith.constant 0 : index
    %21 = vector.load %arg5[%c0_16, %c0_17, %c0_18] : memref<1x8x16xf32, #tpu.memory_space<vmem>>, vector<1x8x16xf32>
    %cst_19 = arith.constant dense<0.000000e+00> : vector<16x16xf32>
    %22 = vector.multi_reduction <add>, %11, %cst_19 [0] : vector<1x16x16xf32> to vector<16x16xf32>
    %23 = vector.shape_cast %22 : vector<16x16xf32> to vector<2x8x16xf32>
    %cst_20 = arith.constant dense<0.000000e+00> : vector<8x16xf32>
    %24 = vector.multi_reduction <add>, %23, %cst_20 [0] : vector<2x8x16xf32> to vector<8x16xf32>
    %25 = vector.shape_cast %24 : vector<8x16xf32> to vector<1x8x16xf32>
    %26 = arith.addf %21, %25 : vector<1x8x16xf32>
    %c0_21 = arith.constant 0 : index
    %c0_22 = arith.constant 0 : index
    %c0_23 = arith.constant 0 : index
    %27 = vector.load %arg5[%c0_21, %c0_22, %c0_23] : memref<1x8x16xf32, #tpu.memory_space<vmem>>, vector<1x8x16xf32>
    tpu.vector_store %arg5[%c0_21, %c0_22, %c0_23], %26 {strides = array<i32>} : memref<1x8x16xf32, #tpu.memory_space<vmem>>, vector<1x8x16xf32>,
    return
  }
  func.func @transform_0(%arg0: i32, %arg1: i32) -> (i32, i32, i32, i32) {
    %c0_i32 = arith.constant 0 : i32
    %c0_i32_0 = arith.constant 0 : i32
    %c0_i32_1 = arith.constant 0 : i32
    return %arg0, %c0_i32, %arg1, %c0_i32_0 : i32, i32, i32, i32
  }
  func.func @transform_1(%arg0: i32, %arg1: i32) -> (i32, i32, i32, i32) {
    %c0_i32 = arith.constant 0 : i32
    %c0_i32_0 = arith.constant 0 : i32
    %c0_i32_1 = arith.constant 0 : i32
    return %arg0, %c0_i32, %arg1, %c0_i32_0 : i32, i32, i32, i32
  }
  func.func @transform_2(%arg0: i32, %arg1: i32) -> (i32, i32, i32) {
    %c0_i32 = arith.constant 0 : i32
    %c0_i32_0 = arith.constant 0 : i32
    %c0_i32_1 = arith.constant 0 : i32
    return %arg0, %c0_i32, %c0_i32_0 : i32, i32, i32
  }
  func.func @transform_3(%arg0: i32, %arg1: i32) -> (i32, i32, i32) {
    %c0_i32 = arith.constant 0 : i32
    %c0_i32_0 = arith.constant 0 : i32
    %c0_i32_1 = arith.constant 0 : i32
    return %arg0, %c0_i32, %c0_i32_0 : i32, i32, i32
  }
}

</mosaic_0001>

<llo_original>
// kernel: tpu_custom_call.1
$region0: #{tpu_custom_call.1}
  #allocation0 [shape = 'u32[]', space=smem, size = 0x4, offset = 0x4, fixed_abs, tag = 'smem constant byte address 0x4 - core index']
  #allocation1 [shape = 'u32[144,128]{1,0:T(1,128)}', space=vmem, size = 0x12000, scoped, tag = 'internal scratch']
  %s0 = inlined_call_operand.hbm [shape: f32[2,4,16,16], index: 0, kind: input, shape index: {}]
  %s1 = inlined_call_operand.hbm [shape: f32[2,1,16,16], index: 1, kind: input, shape index: {}]
  %s2 = inlined_call_operand.hbm [shape: f32[2,8,16], index: 2, kind: output, shape index: {0}]
  %s3 = inlined_call_operand.hbm [shape: f32[2,8,16], index: 3, kind: output, shape index: {1}]
  %4 = xla_tuple %s2, %s3
  %s5 = sld [smem:[#allocation0]]
  $region61: #{tpu_custom_call.1} parent=0
    _
  %s7 = ssub.s32 1, %s5
  %s8 = scalar_select 0, %s7, %s5
  $region1: #{tpu_custom_call.1} parent=0
    #allocation2 [shape = 'u8[16384]{0}', space=vmem, size = 0x4000, scoped, tag = 'input window, operand 0']
    #allocation3 [shape = 's32[2]{0}', space=sflag, size = 0x8, scoped, tag = 'scoped memory for tpu_custom_call.1']
    #allocation4 [shape = 's32[2]{0}', space=sflag, size = 0x8, scoped, tag = 'scoped memory for tpu_custom_call.1']
    #allocation5 [shape = 'u8[16384]{0}', space=vmem, size = 0x4000, scoped, tag = 'input window, operand 1']
    #allocation6 [shape = 's32[2]{0}', space=sflag, size = 0x8, scoped, tag = 'scoped memory for tpu_custom_call.1']
    #allocation7 [shape = 'u8[8192]{0}', space=vmem, size = 0x2000, scoped, tag = 'output window, operand 0']
    #allocation8 [shape = 'u8[8192]{0}', space=vmem, size = 0x2000, scoped, tag = 'output window, operand 1']
    #allocation9 [shape = 's32[2]{0}', space=sflag, size = 0x8, scoped, tag = 'scoped memory for tpu_custom_call.1']
    %9 = vsyncpa [#allocation3], 0
    %s10 = scalar_lea.sflag [#allocation3], 1
    %11 = vsyncpa %s10, 0
    %12 = vsyncpa [#allocation6], 0
    %s13 = scalar_lea.sflag [#allocation6], 1
    %14 = vsyncpa %s13, 0
    %15 = vsyncpa [#allocation4], 0
    %s16 = scalar_lea.sflag [#allocation4], 1
    %17 = vsyncpa %s16, 0
    %18 = vsyncpa [#allocation9], 0
    %s19 = scalar_lea.sflag [#allocation9], 1
    %20 = vsyncpa %s19, 0
    loop: start=0, step=1, limit=4
    $region2: #{tpu_custom_call.1} parent=1 // loop_pre_header
      _
    $region3: #{tpu_custom_call.1} parent=1 // loop_header
      %s22 = sphi 0, %s26
      %p23 = scmp.ge.s32.totalorder %s22, 4
      %s29 = sphi 0, %s41
      %s30 = sphi 0, %s37
      %s31 = sphi 0, %s29
      %s32 = sphi 0, %s30
      %s33 = sphi 0, %s31
      %s34 = sphi 0, %s32
      %s46 = sphi 0, %s48
      %s49 = sphi 0, %s46
      %s50 = sphi 0, %s49
      %s66 = sphi 0, %s50
      %s74 = sphi 0, %s76
      %s77 = sphi 0, %s74
      %s78 = sphi 0, %s77
      %s94 = sphi 0, %s78
      %s100 = sphi 0, %s102
      %s103 = sphi 0, %s100
      %s104 = sphi 0, %s103
      %s120 = sphi 0, %s104
      %s126 = sphi 0, %s128
      %s129 = sphi 0, %s126
      %s130 = sphi 0, %s129
      %s146 = sphi 0, %s130
    $region4: #{tpu_custom_call.1} parent=1 // loop_header_branch
      %25 = sbr.rel (%p23) target = $region8
    $region5: #{tpu_custom_call.1} parent=1 // loop_body
      %s27 = ssub.s32 %s22, 1
      %s28 = ssub.s32 %s22, 2
      %s35 = sadd.s32 1, %s30
      %p36 = scmp.ge.s32.totalorder %s35, 1
      %s37 = scalar_select %p36, 0, %s35
      %s38 = sadd.s32 1, %s29
      %s39 = scalar_select %p36, %s38, %s29
      %p40 = scmp.ge.s32.totalorder %s39, 2
      %s41 = scalar_select %p40, 0, %s39
      %s42 = ssub.s32 %s29, %s41
      %s43 = ssub.s32 %s30, %s37
      %s44 = sor.u32 %s42, %s43
      %p45 = scmp.eq.s32.totalorder %s44, 0
      %s47 = sadd.s32 %s46, 1
      %s48 = scalar_select %p45, %s46, %s47
      %p51 = pneg %p45
      %p52 = scmp.eq.s32.totalorder %s22, 1
      %p53 = por %p51, %p52
      %p54 = scmp.ne.s32.totalorder %s46, %s49
      %p55 = scmp.eq.s32.totalorder %s22, 0
      %p56 = por %p54, %p55
      %p57 = scmp.ne.s32.totalorder %s46, %s49
      %p58 = scmp.eq.s32.totalorder %s27, 1
      %p59 = por %p57, %p58
      %p60 = scmp.ne.s32.totalorder %s49, %s50
      %p61 = scmp.eq.s32.totalorder %s27, 0
      %p62 = por %p60, %p61
      %p63 = scmp.ne.s32.totalorder %s49, %s50
      %p64 = scmp.eq.s32.totalorder %s28, 1
      %p65 = por %p63, %p64
      %p67 = scmp.ne.s32.totalorder %s50, %s66
      %p68 = scmp.eq.s32.totalorder %s28, 0
      %p69 = por %p67, %p68
      %s70 = ssub.s32 %s29, %s41
      %s71 = ssub.s32 %s30, %s37
      %s72 = sor.u32 %s70, %s71
      %p73 = scmp.eq.s32.totalorder %s72, 0
      %s75 = sadd.s32 %s74, 1
      %s76 = scalar_select %p73, %s74, %s75
      %p79 = pneg %p73
      %p80 = scmp.eq.s32.totalorder %s22, 1
      %p81 = por %p79, %p80
      %p82 = scmp.ne.s32.totalorder %s74, %s77
      %p83 = scmp.eq.s32.totalorder %s22, 0
      %p84 = por %p82, %p83
      %p85 = scmp.ne.s32.totalorder %s74, %s77
      %p86 = scmp.eq.s32.totalorder %s27, 1
      %p87 = por %p85, %p86
      %p88 = scmp.ne.s32.totalorder %s77, %s78
      %p89 = scmp.eq.s32.totalorder %s27, 0
      %p90 = por %p88, %p89
      %p91 = scmp.ne.s32.totalorder %s77, %s78
      %p92 = scmp.eq.s32.totalorder %s28, 1
      %p93 = por %p91, %p92
      %p95 = scmp.ne.s32.totalorder %s78, %s94
      %p96 = scmp.eq.s32.totalorder %s28, 0
      %p97 = por %p95, %p96
      %s98 = ssub.s32 %s29, %s41
      %p99 = scmp.eq.s32.totalorder %s98, 0
      %s101 = sadd.s32 %s100, 1
      %s102 = scalar_select %p99, %s100, %s101
      %p105 = pneg %p99
      %p106 = scmp.eq.s32.totalorder %s22, 1
      %p107 = por %p105, %p106
      %p108 = scmp.ne.s32.totalorder %s100, %s103
      %p109 = scmp.eq.s32.totalorder %s22, 0
      %p110 = por %p108, %p109
      %p111 = scmp.ne.s32.totalorder %s100, %s103
      %p112 = scmp.eq.s32.totalorder %s27, 1
      %p113 = por %p111, %p112
      %p114 = scmp.ne.s32.totalorder %s103, %s104
      %p115 = scmp.eq.s32.totalorder %s27, 0
      %p116 = por %p114, %p115
      %p117 = scmp.ne.s32.totalorder %s103, %s104
      %p118 = scmp.eq.s32.totalorder %s28, 1
      %p119 = por %p117, %p118
      %p121 = scmp.ne.s32.totalorder %s104, %s120
      %p122 = scmp.eq.s32.totalorder %s28, 0
      %p123 = por %p121, %p122
      %s124 = ssub.s32 %s29, %s41
      %p125 = scmp.eq.s32.totalorder %s124, 0
      %s127 = sadd.s32 %s126, 1
      %s128 = scalar_select %p125, %s126, %s127
      %p131 = pneg %p125
      %p132 = scmp.eq.s32.totalorder %s22, 1
      %p133 = por %p131, %p132
      %p134 = scmp.ne.s32.totalorder %s126, %s129
      %p135 = scmp.eq.s32.totalorder %s22, 0
      %p136 = por %p134, %p135
      %p137 = scmp.ne.s32.totalorder %s126, %s129
      %p138 = scmp.eq.s32.totalorder %s27, 1
      %p139 = por %p137, %p138
      %p140 = scmp.ne.s32.totalorder %s129, %s130
      %p141 = scmp.eq.s32.totalorder %s27, 0
      %p142 = por %p140, %p141
      %p143 = scmp.ne.s32.totalorder %s129, %s130
      %p144 = scmp.eq.s32.totalorder %s28, 1
      %p145 = por %p143, %p144
      %p147 = scmp.ne.s32.totalorder %s130, %s146
      %p148 = scmp.eq.s32.totalorder %s28, 0
      %p149 = por %p147, %p148
      %p150 = scmp.le.s32.totalorder 1, %s22
      %p151 = scmp.lt.s32.totalorder %s22, 3
      %p152 = pnand %p150, %p151
      %p153 = pneg %p152
      // Predicated region
      $region9: #{tpu_custom_call.1} parent=5 // pred_check
        _
      $region10: #{tpu_custom_call.1} parent=5 // pred_check_branch
        %155 = sbr.rel (%p152) target = $region12
      $region11: #{tpu_custom_call.1} parent=5 // pred_region
        %s156 = ssub.s32 %s22, 1
      $region12: #{tpu_custom_call.1} parent=5 // pred_fallthru
        _
      %p157 = scmp.lt.s32.totalorder %s22, 2
      // Predicated region
      $region13: #{tpu_custom_call.1} parent=5 // pred_check
        %p158 = pneg %p157
      $region14: #{tpu_custom_call.1} parent=5 // pred_check_branch
        %160 = sbr.rel (%p158) target = $region16
      $region15: #{tpu_custom_call.1} parent=5 // pred_region
        // Predicated region
        $region17: #{tpu_custom_call.1} parent=15 // pred_check
          %p161 = pneg %p56
        $region18: #{tpu_custom_call.1} parent=15 // pred_check_branch
          %163 = sbr.rel (%p161) target = $region20
        $region19: #{tpu_custom_call.1} parent=15 // pred_region
          %s164 = sand.u32 %s46, 1
          %s165 = scalar_lea.sflag [#allocation3], %s164
          %s166 = sand.u32 %s46, 1
          %s167 = smul.addr %s166, 16
          %s168 = scalar_lea.vmem [#allocation2], %s167
          %s169 = smul.u32 2, %s30
          %s171 = ssub.s32 256, 256
          %172 = vsyncadd %s165, %s171
          %s173 = smul.addr %s29, 8
          %s174 = sadd.s32 %s169, %s173
          %s175 = smul.addr %s174, 128
          %s176 = scalar_lea.hbm %s0, %s175
          %s177 = sshll.u32 %s168, 4
          %s178 = int_to_ptr.vmem [resolvable:$true] %s177
          %183 = dma.hbm_to_vmem [thread:$0]  %s176, 256, %s178, %s165, 128, 128, 8
        $region20: #{tpu_custom_call.1} parent=15 // pred_fallthru
          _
        // Predicated region
        $region21: #{tpu_custom_call.1} parent=15 // pred_check
          %p184 = pneg %p84
        $region22: #{tpu_custom_call.1} parent=15 // pred_check_branch
          %186 = sbr.rel (%p184) target = $region24
        $region23: #{tpu_custom_call.1} parent=15 // pred_region
          %s187 = sand.u32 %s74, 1
          %s188 = scalar_lea.sflag [#allocation6], %s187
          %s189 = sand.u32 %s74, 1
          %s190 = smul.addr %s189, 16
          %s191 = scalar_lea.vmem [#allocation5], %s190
          %s192 = smul.u32 2, %s30
          %s194 = ssub.s32 256, 256
          %195 = vsyncadd %s188, %s194
          %s196 = smul.addr %s29, 2
          %s197 = sadd.s32 %s192, %s196
          %s198 = smul.addr %s197, 128
          %s199 = scalar_lea.hbm %s1, %s198
          %s200 = sshll.u32 %s191, 4
          %s201 = int_to_ptr.vmem [resolvable:$true] %s200
          %206 = dma.hbm_to_vmem [thread:$0]  %s199, 256, %s201, %s188, 128, 128, 8
        $region24: #{tpu_custom_call.1} parent=15 // pred_fallthru
          _
      $region16: #{tpu_custom_call.1} parent=5 // pred_fallthru
        _
      %p207 = scmp.le.s32.totalorder 1, %s22
      %p208 = scmp.lt.s32.totalorder %s22, 3
      %p209 = pnand %p207, %p208
      %p210 = pneg %p209
      // Predicated region
      $region25: #{tpu_custom_call.1} parent=5 // pred_check
        _
      $region26: #{tpu_custom_call.1} parent=5 // pred_check_branch
        %212 = sbr.rel (%p209) target = $region28
      $region27: #{tpu_custom_call.1} parent=5 // pred_region
        %s213 = ssub.s32 %s22, 1
        %s214 = sand.u32 %s49, 1
        %s215 = scalar_lea.sflag [#allocation3], %s214
        %s216 = sand.u32 %s49, 1
        %s217 = smul.addr %s216, 16
        %s218 = scalar_lea.vmem [#allocation2], %s217
        // Predicated region
        $region29: #{tpu_custom_call.1} parent=27 // pred_check
          %p219 = pneg %p62
        $region30: #{tpu_custom_call.1} parent=27 // pred_check_branch
          %221 = sbr.rel (%p219) target = $region32
        $region31: #{tpu_custom_call.1} parent=27 // pred_region
          %222 = dma.done %s215, 256
        $region32: #{tpu_custom_call.1} parent=27 // pred_fallthru
          _
        %s223 = sand.u32 %s77, 1
        %s224 = scalar_lea.sflag [#allocation6], %s223
        %s225 = sand.u32 %s77, 1
        %s226 = smul.addr %s225, 16
        %s227 = scalar_lea.vmem [#allocation5], %s226
        // Predicated region
        $region33: #{tpu_custom_call.1} parent=27 // pred_check
          %p228 = pneg %p90
        $region34: #{tpu_custom_call.1} parent=27 // pred_check_branch
          %230 = sbr.rel (%p228) target = $region36
        $region35: #{tpu_custom_call.1} parent=27 // pred_region
          %231 = dma.done %s224, 256
        $region36: #{tpu_custom_call.1} parent=27 // pred_fallthru
          _
        %s232 = sand.u32 %s49, 1
        %s233 = scalar_lea.sflag [#allocation3], %s232
        %s234 = sand.u32 %s49, 1
        %s235 = smul.addr %s234, 16
        %s236 = scalar_lea.vmem [#allocation2], %s235
        %p237 = pneg %p62
        %p238 = pneg %p59
        %s239 = sand.u32 %s77, 1
        %s240 = scalar_lea.sflag [#allocation6], %s239
        %s241 = sand.u32 %s77, 1
        %s242 = smul.addr %s241, 16
        %s243 = scalar_lea.vmem [#allocation5], %s242
        %p244 = pneg %p90
        %p245 = pneg %p87
        %p246 = pneg %p116
        %p247 = pneg %p113
        %s248 = sand.u32 %s103, 1
        %s249 = scalar_lea.sflag [#allocation4], %s248
        %s250 = sand.u32 %s103, 1
        %s251 = smul.addr %s250, 8
        %s252 = scalar_lea.vmem [#allocation7], %s251
        %p253 = pneg %p142
        %p254 = pneg %p139
        %s255 = sand.u32 %s129, 1
        %s256 = scalar_lea.sflag [#allocation9], %s255
        %s257 = sand.u32 %s129, 1
        %s258 = smul.addr %s257, 8
        %s259 = scalar_lea.vmem [#allocation8], %s258
        %s260 = smul.u32 2, %s32
        %s261 = smul.u32 2, %s32
        %p262 = scmp.eq.s32.totalorder %s32, 0
        // Predicated region
        $region37: #{tpu_custom_call.1} parent=27 // pred_check
          %p263 = pneg %p262
        $region38: #{tpu_custom_call.1} parent=27 // pred_check_branch
          %265 = sbr.rel (%p263) target = $region40
        $region39: #{tpu_custom_call.1} parent=27 // pred_region
          %vm266 = vcmask 130048
          %267 = vst.msk [vmem:[%s252] sm:$0xff] %vm266, 0.0
          %268 = vst.msk [vmem:[%s259] sm:$0xff] %vm266, 0.0
        $region40: #{tpu_custom_call.1} parent=27 // pred_fallthru
          _
        %v269 = vld [vmem:[%s227] sm:$0xff]
        %v270 = vld [vmem:[%s227 + $0x8] sm:$0xff]
        %v271 = vld [vmem:[%s218] sm:$0xff]
        %v272 = vld [vmem:[%s218 + $0x8] sm:$0xff]
        %v273 = vsub.f32 %v271, %v269
        %v274 = vsub.f32 %v272, %v270
        %vm275 = vcmp.ne.f32.partialorder %v269, -1.0
        %vm276 = vcmp.ne.f32.partialorder %v270, -1.0
        %v277 = vsel %vm275, 1, 0
        %v278 = vsel %vm276, 1, 0
        %v279 = vcvt.s32.f32 %v277
        %v280 = vcvt.s32.f32 %v278
        %v281 = vmul.f32 %v273, %v273
        %v282 = vmul.f32 %v274, %v274
        %v283 = vmul.f32 %v281, %v279
        %v284 = vmul.f32 %v282, %v280
        %v285 = vld [vmem:[%s252] sm:$0xff]
        %v286 = vadd.f32 %v283, 0.0
        %v287 = vadd.f32 %v284, 0.0
        %vm288 = vcmask 130048
        %v289 = vsel %vm288, %v286, 0.0
        %v290 = vsel %vm288, %v287, 0.0
        %v291 = vadd.f32 %v289, %v290
        %v292 = vadd.f32 %v285, %v291
        %293 = vst.msk [vmem:[%s252] sm:$0xff] %vm288, %v292
        %v294 = vld [vmem:[%s259] sm:$0xff]
        %v295 = vadd.f32 %v279, 0.0
        %v296 = vadd.f32 %v280, 0.0
        %v297 = vsel %vm288, %v295, 0.0
        %v298 = vsel %vm288, %v296, 0.0
        %v299 = vadd.f32 %v297, %v298
        %v300 = vadd.f32 %v294, %v299
        %301 = vst.msk [vmem:[%s259] sm:$0xff] %vm288, %v300
        %s302 = sand.u32 %s103, 1
        %s303 = scalar_lea.sflag [#allocation4], %s302
        %s304 = sand.u32 %s103, 1
        %s305 = smul.addr %s304, 8
        %s306 = scalar_lea.vmem [#allocation7], %s305
        %s307 = sand.u32 %s129, 1
        %s308 = scalar_lea.sflag [#allocation9], %s307
        %s309 = sand.u32 %s129, 1
        %s310 = smul.addr %s309, 8
        %s311 = scalar_lea.vmem [#allocation8], %s310
        // Predicated region
        $region41: #{tpu_custom_call.1} parent=27 // pred_check
          %p312 = pneg %p113
        $region42: #{tpu_custom_call.1} parent=27 // pred_check_branch
          %314 = sbr.rel (%p312) target = $region44
        $region43: #{tpu_custom_call.1} parent=27 // pred_region
          %s316 = ssub.s32 128, 128
          %317 = vsyncadd %s303, %s316
          %s318 = smul.addr %s31, 128
          %s319 = scalar_lea.hbm %s2, %s318
          %s321 = sshll.u32 %s306, 4
          %s322 = int_to_ptr.vmem [resolvable:$true] %s321
          %324 = dma.vmem_to_hbm [thread:$0]  %s322, 128, %s319, %s303
        $region44: #{tpu_custom_call.1} parent=27 // pred_fallthru
          _
        // Predicated region
        $region45: #{tpu_custom_call.1} parent=27 // pred_check
          %p325 = pneg %p139
        $region46: #{tpu_custom_call.1} parent=27 // pred_check_branch
          %327 = sbr.rel (%p325) target = $region48
        $region47: #{tpu_custom_call.1} parent=27 // pred_region
          %s329 = ssub.s32 128, 128
          %330 = vsyncadd %s308, %s329
          %s331 = smul.addr %s31, 128
          %s332 = scalar_lea.hbm %s3, %s331
          %s334 = sshll.u32 %s311, 4
          %s335 = int_to_ptr.vmem [resolvable:$true] %s334
          %337 = dma.vmem_to_hbm [thread:$0]  %s335, 128, %s332, %s308
        $region48: #{tpu_custom_call.1} parent=27 // pred_fallthru
          _
      $region28: #{tpu_custom_call.1} parent=5 // pred_fallthru
        _
      %p338 = scmp.le.s32.totalorder 2, %s22
      // Predicated region
      $region49: #{tpu_custom_call.1} parent=5 // pred_check
        %p339 = pneg %p338
      $region50: #{tpu_custom_call.1} parent=5 // pred_check_branch
        %341 = sbr.rel (%p339) target = $region52
      $region51: #{tpu_custom_call.1} parent=5 // pred_region
        %s342 = ssub.s32 %s22, 2
        // Predicated region
        $region53: #{tpu_custom_call.1} parent=51 // pred_check
          %p343 = pneg %p119
        $region54: #{tpu_custom_call.1} parent=51 // pred_check_branch
          %345 = sbr.rel (%p343) target = $region56
        $region55: #{tpu_custom_call.1} parent=51 // pred_region
          %s346 = sand.u32 %s104, 1
          %s347 = scalar_lea.sflag [#allocation4], %s346
          %s348 = sand.u32 %s104, 1
          %s349 = smul.addr %s348, 8
          %s350 = scalar_lea.vmem [#allocation7], %s349
          %351 = dma.done %s347, 128
        $region56: #{tpu_custom_call.1} parent=51 // pred_fallthru
          _
        // Predicated region
        $region57: #{tpu_custom_call.1} parent=51 // pred_check
          %p352 = pneg %p145
        $region58: #{tpu_custom_call.1} parent=51 // pred_check_branch
          %354 = sbr.rel (%p352) target = $region60
        $region59: #{tpu_custom_call.1} parent=51 // pred_region
          %s355 = sand.u32 %s130, 1
          %s356 = scalar_lea.sflag [#allocation9], %s355
          %s357 = sand.u32 %s130, 1
          %s358 = smul.addr %s357, 8
          %s359 = scalar_lea.vmem [#allocation8], %s358
          %360 = dma.done %s356, 128
        $region60: #{tpu_custom_call.1} parent=51 // pred_fallthru
          _
      $region52: #{tpu_custom_call.1} parent=5 // pred_fallthru
        _
    $region6: #{tpu_custom_call.1} parent=1 // loop_footer
      %s26 = sadd.s32 1, %s22
    $region7: #{tpu_custom_call.1} parent=1 // loop_footer_branch
      %21 = sbr.rel target = $region3
    $region8: #{tpu_custom_call.1} parent=1 // loop_exit
      _
    %361 = vsyncpa [#allocation3], 1
    %s362 = scalar_lea.sflag [#allocation3], 1
    %363 = vsyncpa %s362, 1
    %364 = vsyncpa [#allocation6], 1
    %s365 = scalar_lea.sflag [#allocation6], 1
    %366 = vsyncpa %s365, 1
    %367 = vsyncpa [#allocation4], 1
    %s368 = scalar_lea.sflag [#allocation4], 1
    %369 = vsyncpa %s368, 1
    %370 = vsyncpa [#allocation9], 1
    %s371 = scalar_lea.sflag [#allocation9], 1
    %372 = vsyncpa %s371, 1

</llo_original>
